<compile_context>
chip_gen: v5e
topology: v5e:2x2
jax: 0.10.0
libtpu: 0.0.40
codegen_flags: <defaults>
</compile_context>

<pallas_src>
import jax
import jax.numpy as jnp
from jax.experimental import pallas as pl
from jax.experimental.pallas import tpu as pltpu


def _round_up(x, m):
    return ((x + m - 1) // m) * m


def _pad2d(x, rows, cols):
    r, c = x.shape
    return jnp.pad(x, ((0, rows - r), (0, cols - c)))


def fusion_kernel(xc_ref, wc_ref, bc_ref,
                  xl_ref, wl_ref, bl_ref,
                  wf_cam_ref, wf_lid_ref, bf_ref,
                  out_ref, acc_ref):
    k = pl.program_id(1)

    # Init camera-feature accumulator at start of the reduction axis.
    @pl.when(k == 0)
    def _():
        acc_ref[...] = jnp.zeros_like(acc_ref)

    # Camera modality net: K-tiled matmul accumulated in f32 VMEM scratch.
    acc_ref[...] += jnp.dot(xc_ref[...], wc_ref[...],
                            preferred_element_type=jnp.float32)

    # Finalize: bias+ReLU for camera, full lidar modality net, fused projection.
    @pl.when(k == pl.num_programs(1) - 1)
    def _():
        f_cam = jnp.maximum(acc_ref[...] + bc_ref[...], 0.0)
        f_lid = jnp.maximum(
            jnp.dot(xl_ref[...], wl_ref[...],
                    preferred_element_type=jnp.float32) + bl_ref[...], 0.0)
        out = (jnp.dot(f_cam, wf_cam_ref[...],
                       preferred_element_type=jnp.float32)
               + jnp.dot(f_lid, wf_lid_ref[...],
                         preferred_element_type=jnp.float32)
               + bf_ref[...])
        out_ref[...] = out.astype(out_ref.dtype)


def fusion_forward(data_dict, params):
    """Concrete FusionModel forward. data_dict: {'camera': NCHW, 'lidar': NCT}."""
    x_cam = data_dict["camera"]
    x_lid = data_dict["lidar"]
    B = x_cam.shape[0]

    # ModelBaseClass.num_flat_features: product of all dims after batch.
    cam_flat = x_cam.reshape(B, -1).astype(jnp.float32)   # [B, C*H*W]
    lid_flat = x_lid.reshape(B, -1).astype(jnp.float32)   # [B, C*T]

    (w_cam, b_cam, w_lid, b_lid, w_fus_cam, w_fus_lid, b_fus) = params
    cam_feat = cam_flat.shape[1]
    lid_feat = lid_flat.shape[1]
    hidden = w_cam.shape[1]
    out_dim = b_fus.shape[-1]

    # ---- tile sizes ------------------------------------------------------
    # Batch tile: multiple of 8 (f32 sublane), capped at 128.
    TB = 128 if B >= 128 else _round_up(B, 8)
    B_pad = _round_up(B, TB)
    # Camera contraction tile: multiple of 128, capped at 512.
    TK = 512 if cam_feat >= 512 else _round_up(cam_feat, 128)
    K_pad = _round_up(cam_feat, TK)
    # Lane-dense feature dims (multiples of 128 -> full-width MXU / unmasked vst).
    Lp = _round_up(lid_feat, 128)
    Hp = _round_up(hidden, 128)
    Op = _round_up(out_dim, 128)

    # ---- zero-pad operands (padding contributes exact zeros) -------------
    xc = _pad2d(cam_flat, B_pad, K_pad)
    xl = _pad2d(lid_flat, B_pad, Lp)
    wc = _pad2d(w_cam, K_pad, Hp)
    bc = _pad2d(b_cam.reshape(1, -1), 1, Hp)
    wl = _pad2d(w_lid, Lp, Hp)
    bl = _pad2d(b_lid.reshape(1, -1), 1, Hp)
    wfc = _pad2d(w_fus_cam, Hp, Op)
    wfl = _pad2d(w_fus_lid, Hp, Op)
    bf = _pad2d(b_fus.reshape(1, -1), 1, Op)

    grid = (B_pad // TB, K_pad // TK)

    def const_spec(shape):
        return pl.BlockSpec(shape, lambda b, k: (0,) * len(shape))

    out = pl.pallas_call(
        fusion_kernel,
        out_shape=jax.ShapeDtypeStruct((B_pad, Op), jnp.float32),
        grid=grid,
        in_specs=[
            pl.BlockSpec((TB, TK), lambda b, k: (b, k)),      # camera activations
            pl.BlockSpec((TK, Hp), lambda b, k: (k, 0)),      # camera weight chunk
            const_spec((1, Hp)),                              # camera bias
            pl.BlockSpec((TB, Lp), lambda b, k: (b, 0)),      # lidar activations
            const_spec((Lp, Hp)),                             # lidar weight (resident)
            const_spec((1, Hp)),                              # lidar bias
            const_spec((Hp, Op)),                             # fusion weight (camera)
            const_spec((Hp, Op)),                             # fusion weight (lidar)
            const_spec((1, Op)),                              # fusion bias
        ],
        out_specs=pl.BlockSpec((TB, Op), lambda b, k: (b, 0)),
        scratch_shapes=[pltpu.VMEM((TB, Hp), jnp.float32)],
        compiler_params=pltpu.CompilerParams(
            dimension_semantics=("parallel", "arbitrary"),
            vmem_limit_bytes=32 * 1024 * 1024,
        ),
    )(xc, wc, bc, xl, wl, bl, wfc, wfl, bf)

    return out[:B, :out_dim]


def fusion_forward_ref(data_dict, params):
    """Pure-JAX reference for correctness checking."""
    x_cam = data_dict["camera"]
    x_lid = data_dict["lidar"]
    B = x_cam.shape[0]
    cam_flat = x_cam.reshape(B, -1)
    lid_flat = x_lid.reshape(B, -1)
    (w_cam, b_cam, w_lid, b_lid, w_fus_cam, w_fus_lid, b_fus) = params
    f_cam = jnp.maximum(cam_flat @ w_cam + b_cam, 0.0)
    f_lid = jnp.maximum(lid_flat @ w_lid + b_lid, 0.0)
    return f_cam @ w_fus_cam + f_lid @ w_fus_lid + b_fus


def make_params(key, cam_feat, lid_feat, hidden, out_dim):
    ks = jax.random.split(key, 7)
    scale = 0.05
    w_cam = scale * jax.random.normal(ks[0], (cam_feat, hidden), jnp.float32)
    b_cam = scale * jax.random.normal(ks[1], (1, hidden), jnp.float32)
    w_lid = scale * jax.random.normal(ks[2], (lid_feat, hidden), jnp.float32)
    b_lid = scale * jax.random.normal(ks[3], (1, hidden), jnp.float32)
    w_fus_cam = scale * jax.random.normal(ks[4], (hidden, out_dim), jnp.float32)
    w_fus_lid = scale * jax.random.normal(ks[5], (hidden, out_dim), jnp.float32)
    b_fus = scale * jax.random.normal(ks[6], (1, out_dim), jnp.float32)
    return (w_cam, b_cam, w_lid, b_lid, w_fus_cam, w_fus_lid, b_fus)


if __name__ == "__main__":
    key = jax.random.PRNGKey(0)
    k_cam, k_lid, k_par = jax.random.split(key, 3)

    # Small shapes consistent with the module's sensor conventions.
    B, C, H, W = 2, 4, 16, 16     # camera: image NCHW
    Ct, T = 4, 8                  # lidar: timeseries NCT
    hidden, out_dim = 32, 16

    data_dict = {
        "camera": jax.random.normal(k_cam, (B, C, H, W), jnp.float32),
        "lidar": jax.random.normal(k_lid, (B, Ct, T), jnp.float32),
    }
    params = make_params(k_par, C * H * W, Ct * T, hidden, out_dim)

    out = fusion_forward(data_dict, params)
    out = jax.block_until_ready(out)

    ref = fusion_forward_ref(data_dict, params)
    assert out.shape == (B, out_dim), out.shape
    assert jnp.allclose(out, ref, atol=1e-4, rtol=1e-4), "mismatch vs reference"

    # num_flat_features / shape_output_features semantics from ModelBaseClass.
    num_flat = 1
    for s in out.shape[1:]:
        num_flat *= s
    assert num_flat == out_dim

    print("KERNEL_OK")
</pallas_src>

<mosaic_0001>
module attributes {stable_mosaic.version = 11 : i64} {
  func.func @fusion_kernel(%arg0: i32, %arg1: i32, %arg2: memref<8x512xf32, #tpu.memory_space<vmem>>, %arg3: memref<512x128xf32, #tpu.memory_space<vmem>>, %arg4: memref<1x128xf32, #tpu.memory_space<vmem>>, %arg5: memref<8x128xf32, #tpu.memory_space<vmem>>, %arg6: memref<128x128xf32, #tpu.memory_space<vmem>>, %arg7: memref<1x128xf32, #tpu.memory_space<vmem>>, %arg8: memref<128x128xf32, #tpu.memory_space<vmem>>, %arg9: memref<128x128xf32, #tpu.memory_space<vmem>>, %arg10: memref<1x128xf32, #tpu.memory_space<vmem>>, %arg11: memref<8x128xf32, #tpu.memory_space<vmem>>, %arg12: memref<8x128xf32, #tpu.memory_space<vmem>>) attributes {dimension_semantics = [#tpu.dimension_semantics<parallel>, #tpu.dimension_semantics<arbitrary>], iteration_bounds = array<i64: 1, 2>, scalar_prefetch = 0 : i64, scratch_operands = 1 : i64, tpu.core_type = #tpu.core_type<tc>, window_params = [{transform_indices = @transform_0, window_bounds = array<i64: 8, 512>}, {transform_indices = @transform_1, window_bounds = array<i64: 512, 128>}, {pipeline_mode = #tpu.pipeline_mode<synchronous>, transform_indices = @transform_2, window_bounds = array<i64: 1, 128>}, {transform_indices = @transform_3, window_bounds = array<i64: 8, 128>}, {pipeline_mode = #tpu.pipeline_mode<synchronous>, transform_indices = @transform_4, window_bounds = array<i64: 128, 128>}, {pipeline_mode = #tpu.pipeline_mode<synchronous>, transform_indices = @transform_5, window_bounds = array<i64: 1, 128>}, {pipeline_mode = #tpu.pipeline_mode<synchronous>, transform_indices = @transform_6, window_bounds = array<i64: 128, 128>}, {pipeline_mode = #tpu.pipeline_mode<synchronous>, transform_indices = @transform_7, window_bounds = array<i64: 128, 128>}, {pipeline_mode = #tpu.pipeline_mode<synchronous>, transform_indices = @transform_8, window_bounds = array<i64: 1, 128>}, {transform_indices = @transform_9, window_bounds = array<i64: 8, 128>}]} {
    %c0_i32 = arith.constant 0 : i32
    %0 = arith.cmpi eq, %arg1, %c0_i32 : i32
    %1 = arith.extui %0 : i1 to i32
    %c0_i32_0 = arith.constant 0 : i32
    %2 = arith.cmpi ne, %1, %c0_i32_0 : i32
    scf.if %2 {
      %cst_9 = arith.constant 0.000000e+00 : f32
      %12 = vector.broadcast %cst_9 : f32 to vector<8x128xf32>
      %c0_10 = arith.constant 0 : index
      %c0_11 = arith.constant 0 : index
      %13 = vector.load %arg12[%c0_10, %c0_11] : memref<8x128xf32, #tpu.memory_space<vmem>>, vector<8x128xf32>
      tpu.vector_store %arg12[%c0_10, %c0_11], %12 {strides = array<i32>} : memref<8x128xf32, #tpu.memory_space<vmem>>, vector<8x128xf32>,
    } else {
    }
    %c0 = arith.constant 0 : index
    %c0_1 = arith.constant 0 : index
    %3 = vector.load %arg12[%c0, %c0_1] : memref<8x128xf32, #tpu.memory_space<vmem>>, vector<8x128xf32>
    %c0_2 = arith.constant 0 : index
    %c0_3 = arith.constant 0 : index
    %4 = vector.load %arg2[%c0_2, %c0_3] : memref<8x512xf32, #tpu.memory_space<vmem>>, vector<8x512xf32>
    %c0_4 = arith.constant 0 : index
    %c0_5 = arith.constant 0 : index
    %5 = vector.load %arg3[%c0_4, %c0_5] : memref<512x128xf32, #tpu.memory_space<vmem>>, vector<512x128xf32>
    %cst = arith.constant dense<0.000000e+00> : vector<8x128xf32>
    %6 = tpu.matmul %4, %5, %cst {dimension_numbers = #tpu.dot_dimension_numbers<[1], [0], [0], [1], [0, 0, 1, 1], [], []>} : vector<8x512xf32>, vector<512x128xf32>, vector<8x128xf32> -> vector<8x128xf32>
    %7 = arith.addf %3, %6 : vector<8x128xf32>
    %c0_6 = arith.constant 0 : index
    %c0_7 = arith.constant 0 : index
    %8 = vector.load %arg12[%c0_6, %c0_7] : memref<8x128xf32, #tpu.memory_space<vmem>>, vector<8x128xf32>
    tpu.vector_store %arg12[%c0_6, %c0_7], %7 {strides = array<i32>} : memref<8x128xf32, #tpu.memory_space<vmem>>, vector<8x128xf32>,
    %c1_i32 = arith.constant 1 : i32
    %9 = arith.cmpi eq, %arg1, %c1_i32 : i32
    %10 = arith.extui %9 : i1 to i32
    %c0_i32_8 = arith.constant 0 : i32
    %11 = arith.cmpi ne, %10, %c0_i32_8 : i32
    scf.if %11 {
      %c0_9 = arith.constant 0 : index
      %c0_10 = arith.constant 0 : index
      %12 = vector.load %arg12[%c0_9, %c0_10] : memref<8x128xf32, #tpu.memory_space<vmem>>, vector<8x128xf32>
      %c0_11 = arith.constant 0 : index
      %c0_12 = arith.constant 0 : index
      %13 = vector.load %arg4[%c0_11, %c0_12] : memref<1x128xf32, #tpu.memory_space<vmem>>, vector<1x128xf32>
      %14 = vector.broadcast %13 : vector<1x128xf32> to vector<8x128xf32>
      %15 = arith.addf %12, %14 : vector<8x128xf32>
      %cst_13 = arith.constant 0.000000e+00 : f32
      %16 = vector.broadcast %cst_13 : f32 to vector<8x128xf32>
      %17 = arith.maximumf %15, %16 : vector<8x128xf32>
      %c0_14 = arith.constant 0 : index
      %c0_15 = arith.constant 0 : index
      %18 = vector.load %arg5[%c0_14, %c0_15] : memref<8x128xf32, #tpu.memory_space<vmem>>, vector<8x128xf32>
      %c0_16 = arith.constant 0 : index
      %c0_17 = arith.constant 0 : index
      %19 = vector.load %arg6[%c0_16, %c0_17] : memref<128x128xf32, #tpu.memory_space<vmem>>, vector<128x128xf32>
      %cst_18 = arith.constant dense<0.000000e+00> : vector<8x128xf32>
      %20 = tpu.matmul %18, %19, %cst_18 {dimension_numbers = #tpu.dot_dimension_numbers<[1], [0], [0], [1], [0, 0, 1, 1], [], []>} : vector<8x128xf32>, vector<128x128xf32>, vector<8x128xf32> -> vector<8x128xf32>
      %c0_19 = arith.constant 0 : index
      %c0_20 = arith.constant 0 : index
      %21 = vector.load %arg7[%c0_19, %c0_20] : memref<1x128xf32, #tpu.memory_space<vmem>>, vector<1x128xf32>
      %22 = vector.broadcast %21 : vector<1x128xf32> to vector<8x128xf32>
      %23 = arith.addf %20, %22 : vector<8x128xf32>
      %cst_21 = arith.constant 0.000000e+00 : f32
      %24 = vector.broadcast %cst_21 : f32 to vector<8x128xf32>
      %25 = arith.maximumf %23, %24 : vector<8x128xf32>
      %c0_22 = arith.constant 0 : index
      %c0_23 = arith.constant 0 : index
      %26 = vector.load %arg8[%c0_22, %c0_23] : memref<128x128xf32, #tpu.memory_space<vmem>>, vector<128x128xf32>
      %cst_24 = arith.constant dense<0.000000e+00> : vector<8x128xf32>
      %27 = tpu.matmul %17, %26, %cst_24 {dimension_numbers = #tpu.dot_dimension_numbers<[1], [0], [0], [1], [0, 0, 1, 1], [], []>} : vector<8x128xf32>, vector<128x128xf32>, vector<8x128xf32> -> vector<8x128xf32>
      %c0_25 = arith.constant 0 : index
      %c0_26 = arith.constant 0 : index
      %28 = vector.load %arg9[%c0_25, %c0_26] : memref<128x128xf32, #tpu.memory_space<vmem>>, vector<128x128xf32>
      %cst_27 = arith.constant dense<0.000000e+00> : vector<8x128xf32>
      %29 = tpu.matmul %25, %28, %cst_27 {dimension_numbers = #tpu.dot_dimension_numbers<[1], [0], [0], [1], [0, 0, 1, 1], [], []>} : vector<8x128xf32>, vector<128x128xf32>, vector<8x128xf32> -> vector<8x128xf32>
      %30 = arith.addf %27, %29 : vector<8x128xf32>
      %c0_28 = arith.constant 0 : index
      %c0_29 = arith.constant 0 : index
      %31 = vector.load %arg10[%c0_28, %c0_29] : memref<1x128xf32, #tpu.memory_space<vmem>>, vector<1x128xf32>
      %32 = vector.broadcast %31 : vector<1x128xf32> to vector<8x128xf32>
      %33 = arith.addf %30, %32 : vector<8x128xf32>
      %c0_30 = arith.constant 0 : index
      %c0_31 = arith.constant 0 : index
      %34 = vector.load %arg11[%c0_30, %c0_31] : memref<8x128xf32, #tpu.memory_space<vmem>>, vector<8x128xf32>
      tpu.vector_store %arg11[%c0_30, %c0_31], %33 {strides = array<i32>} : memref<8x128xf32, #tpu.memory_space<vmem>>, vector<8x128xf32>,
    } else {
    }
    return
  }
  func.func @transform_0(%arg0: i32, %arg1: i32) -> (i32, i32) {
    %c0_i32 = arith.constant 0 : i32
    return %arg0, %arg1 : i32, i32
  }
  func.func @transform_1(%arg0: i32, %arg1: i32) -> (i32, i32) {
    %c0_i32 = arith.constant 0 : i32
    %c0_i32_0 = arith.constant 0 : i32
    return %arg1, %c0_i32 : i32, i32
  }
  func.func @transform_2(%arg0: i32, %arg1: i32) -> (i32, i32) {
    %c0_i32 = arith.constant 0 : i32
    %c0_i32_0 = arith.constant 0 : i32
    %c0_i32_1 = arith.constant 0 : i32
    return %c0_i32, %c0_i32_0 : i32, i32
  }
  func.func @transform_3(%arg0: i32, %arg1: i32) -> (i32, i32) {
    %c0_i32 = arith.constant 0 : i32
    %c0_i32_0 = arith.constant 0 : i32
    return %arg0, %c0_i32 : i32, i32
  }
  func.func @transform_4(%arg0: i32, %arg1: i32) -> (i32, i32) {
    %c0_i32 = arith.constant 0 : i32
    %c0_i32_0 = arith.constant 0 : i32
    %c0_i32_1 = arith.constant 0 : i32
    return %c0_i32, %c0_i32_0 : i32, i32
  }
  func.func @transform_5(%arg0: i32, %arg1: i32) -> (i32, i32) {
    %c0_i32 = arith.constant 0 : i32
    %c0_i32_0 = arith.constant 0 : i32
    %c0_i32_1 = arith.constant 0 : i32
    return %c0_i32, %c0_i32_0 : i32, i32
  }
  func.func @transform_6(%arg0: i32, %arg1: i32) -> (i32, i32) {
    %c0_i32 = arith.constant 0 : i32
    %c0_i32_0 = arith.constant 0 : i32
    %c0_i32_1 = arith.constant 0 : i32
    return %c0_i32, %c0_i32_0 : i32, i32
  }
  func.func @transform_7(%arg0: i32, %arg1: i32) -> (i32, i32) {
    %c0_i32 = arith.constant 0 : i32
    %c0_i32_0 = arith.constant 0 : i32
    %c0_i32_1 = arith.constant 0 : i32
    return %c0_i32, %c0_i32_0 : i32, i32
  }
  func.func @transform_8(%arg0: i32, %arg1: i32) -> (i32, i32) {
    %c0_i32 = arith.constant 0 : i32
    %c0_i32_0 = arith.constant 0 : i32
    %c0_i32_1 = arith.constant 0 : i32
    return %c0_i32, %c0_i32_0 : i32, i32
  }
  func.func @transform_9(%arg0: i32, %arg1: i32) -> (i32, i32) {
    %c0_i32 = arith.constant 0 : i32
    %c0_i32_0 = arith.constant 0 : i32
    return %arg0, %c0_i32 : i32, i32
  }
}

</mosaic_0001>

<llo_original>
// kernel: tpu_custom_call.1
$region0: #{tpu_custom_call.1}
  #allocation0 [shape = 'u32[]', space=smem, size = 0x4, offset = 0x4, fixed_abs, tag = 'smem constant byte address 0x4 - core index']
  #allocation1 [shape = 'u32[72,128]{1,0:T(1,128)}', space=vmem, size = 0x9000, scoped, tag = 'internal scratch']
  #allocation2 [shape = 'f32[8,128]{1,0:T(8,128)}', space=vmem, size = 0x1000, scoped, tag = 'scratch operand']
  %s0 = inlined_call_operand.hbm [shape: f32[8,1024], index: 0, kind: input, shape index: {}]
  %s1 = inlined_call_operand.hbm [shape: f32[1024,128], index: 1, kind: input, shape index: {}]
  %s2 = inlined_call_operand.vmem [shape: f32[1,128], index: 2, kind: input, shape index: {}]
  %s3 = inlined_call_operand.hbm [shape: f32[8,128], index: 3, kind: input, shape index: {}]
  %s4 = inlined_call_operand.hbm [shape: f32[128,128], index: 4, kind: input, shape index: {}]
  %s5 = inlined_call_operand.vmem [shape: f32[1,128], index: 5, kind: input, shape index: {}]
  %s6 = inlined_call_operand.hbm [shape: f32[128,128], index: 6, kind: input, shape index: {}]
  %s7 = inlined_call_operand.hbm [shape: f32[128,128], index: 7, kind: input, shape index: {}]
  %s8 = inlined_call_operand.vmem [shape: f32[1,128], index: 8, kind: input, shape index: {}]
  %s9 = inlined_call_operand.hbm [shape: f32[8,128], index: 9, kind: output, shape index: {}]
  %s10 = sld [smem:[#allocation0]]
  $region101: #{tpu_custom_call.1} parent=0
    _
  %s12 = ssub.s32 1, %s10
  %s13 = scalar_select 0, %s12, %s10
  $region1: #{tpu_custom_call.1} parent=0
    #allocation3 [shape = 'u8[32768]{0}', space=vmem, size = 0x8000, scoped, tag = 'input window, operand 0']
    #allocation4 [shape = 's32[2]{0}', space=sflag, size = 0x8, scoped, tag = 'scoped memory for tpu_custom_call.1']
    #allocation5 [shape = 's32[2]{0}', space=sflag, size = 0x8, scoped, tag = 'scoped memory for tpu_custom_call.1']
    #allocation6 [shape = 'u8[524288]{0}', space=vmem, size = 0x80000, scoped, tag = 'input window, operand 1']
    #allocation7 [shape = 's32[2]{0}', space=sflag, size = 0x8, scoped, tag = 'scoped memory for tpu_custom_call.1']
    #allocation8 [shape = 'u8[4096]{0}', space=vmem, size = 0x1000, scoped, tag = 'input window, operand 3, single buffered']
    #allocation9 [shape = 'u8[65536]{0}', space=vmem, size = 0x10000, scoped, tag = 'input window, operand 4, single buffered']
    #allocation10 [shape = 's32[1]{0}', space=sflag, size = 0x4, scoped, tag = 'scoped memory for tpu_custom_call.1']
    #allocation11 [shape = 'u8[65536]{0}', space=vmem, size = 0x10000, scoped, tag = 'input window, operand 6, single buffered']
    #allocation12 [shape = 'u8[65536]{0}', space=vmem, size = 0x10000, scoped, tag = 'input window, operand 7, single buffered']
    #allocation13 [shape = 's32[1]{0}', space=sflag, size = 0x4, scoped, tag = 'scoped memory for tpu_custom_call.1']
    #allocation14 [shape = 'u8[4096]{0}', space=vmem, size = 0x1000, scoped, tag = 'output window, operand 0, single buffered']
    %14 = vsyncpa [#allocation4], 0
    %s15 = scalar_lea.sflag [#allocation4], 1
    %16 = vsyncpa %s15, 0
    %17 = vsyncpa [#allocation7], 0
    %s18 = scalar_lea.sflag [#allocation7], 1
    %19 = vsyncpa %s18, 0
    %20 = vsyncpa [#allocation10], 0
    %21 = vsyncpa [#allocation13], 0
    %22 = vsyncpa [#allocation5], 0
    loop: start=0, step=1, limit=4
    $region2: #{tpu_custom_call.1} parent=1 // loop_pre_header
      _
    $region3: #{tpu_custom_call.1} parent=1 // loop_header
      %s24 = sphi 0, %s28
      %p25 = scmp.ge.s32.totalorder %s24, 4
      %s31 = sphi 0, %s43
      %s32 = sphi 0, %s39
      %s33 = sphi 0, %s31
      %s34 = sphi 0, %s32
      %s35 = sphi 0, %s33
      %s36 = sphi 0, %s34
      %s48 = sphi 0, %s50
      %s51 = sphi 0, %s48
      %s52 = sphi 0, %s51
      %s68 = sphi 0, %s52
      %s74 = sphi 0, %s76
      %s77 = sphi 0, %s74
      %s78 = sphi 0, %s77
      %s94 = sphi 0, %s78
      %s98 = sphi 0, %s98
      %s100 = sphi 0, %s98
      %s101 = sphi 0, %s100
      %s115 = sphi 0, %s101
      %s121 = sphi 0, %s123
      %s124 = sphi 0, %s121
      %s125 = sphi 0, %s124
      %s141 = sphi 0, %s125
      %s145 = sphi 0, %s145
      %s147 = sphi 0, %s145
      %s148 = sphi 0, %s147
      %s162 = sphi 0, %s148
      %s166 = sphi 0, %s166
      %s168 = sphi 0, %s166
      %s169 = sphi 0, %s168
      %s183 = sphi 0, %s169
      %s187 = sphi 0, %s187
      %s189 = sphi 0, %s187
      %s190 = sphi 0, %s189
      %s204 = sphi 0, %s190
      %s208 = sphi 0, %s208
      %s210 = sphi 0, %s208
      %s211 = sphi 0, %s210
      %s225 = sphi 0, %s211
      %s229 = sphi 0, %s229
      %s231 = sphi 0, %s229
      %s232 = sphi 0, %s231
      %s246 = sphi 0, %s232
      %s252 = sphi 0, %s254
      %s255 = sphi 0, %s252
      %s256 = sphi 0, %s255
      %s272 = sphi 0, %s256
    $region4: #{tpu_custom_call.1} parent=1 // loop_header_branch
      %27 = sbr.rel (%p25) target = $region8
    $region5: #{tpu_custom_call.1} parent=1 // loop_body
      %s29 = ssub.s32 %s24, 1
      %s30 = ssub.s32 %s24, 2
      %s37 = sadd.s32 1, %s32
      %p38 = scmp.ge.s32.totalorder %s37, 2
      %s39 = scalar_select %p38, 0, %s37
      %s40 = sadd.s32 1, %s31
      %s41 = scalar_select %p38, %s40, %s31
      %p42 = scmp.ge.s32.totalorder %s41, 1
      %s43 = scalar_select %p42, 0, %s41
      %s44 = ssub.s32 %s31, %s43
      %s45 = ssub.s32 %s32, %s39
      %s46 = sor.u32 %s44, %s45
      %p47 = scmp.eq.s32.totalorder %s46, 0
      %s49 = sadd.s32 %s48, 1
      %s50 = scalar_select %p47, %s48, %s49
      %p53 = pneg %p47
      %p54 = scmp.eq.s32.totalorder %s24, 1
      %p55 = por %p53, %p54
      %p56 = scmp.ne.s32.totalorder %s48, %s51
      %p57 = scmp.eq.s32.totalorder %s24, 0
      %p58 = por %p56, %p57
      %p59 = scmp.ne.s32.totalorder %s48, %s51
      %p60 = scmp.eq.s32.totalorder %s29, 1
      %p61 = por %p59, %p60
      %p62 = scmp.ne.s32.totalorder %s51, %s52
      %p63 = scmp.eq.s32.totalorder %s29, 0
      %p64 = por %p62, %p63
      %p65 = scmp.ne.s32.totalorder %s51, %s52
      %p66 = scmp.eq.s32.totalorder %s30, 1
      %p67 = por %p65, %p66
      %p69 = scmp.ne.s32.totalorder %s52, %s68
      %p70 = scmp.eq.s32.totalorder %s30, 0
      %p71 = por %p69, %p70
      %s72 = ssub.s32 %s32, %s39
      %p73 = scmp.eq.s32.totalorder %s72, 0
      %s75 = sadd.s32 %s74, 1
      %s76 = scalar_select %p73, %s74, %s75
      %p79 = pneg %p73
      %p80 = scmp.eq.s32.totalorder %s24, 1
      %p81 = por %p79, %p80
      %p82 = scmp.ne.s32.totalorder %s74, %s77
      %p83 = scmp.eq.s32.totalorder %s24, 0
      %p84 = por %p82, %p83
      %p85 = scmp.ne.s32.totalorder %s74, %s77
      %p86 = scmp.eq.s32.totalorder %s29, 1
      %p87 = por %p85, %p86
      %p88 = scmp.ne.s32.totalorder %s77, %s78
      %p89 = scmp.eq.s32.totalorder %s29, 0
      %p90 = por %p88, %p89
      %p91 = scmp.ne.s32.totalorder %s77, %s78
      %p92 = scmp.eq.s32.totalorder %s30, 1
      %p93 = por %p91, %p92
      %p95 = scmp.ne.s32.totalorder %s78, %s94
      %p96 = scmp.eq.s32.totalorder %s30, 0
      %p97 = por %p95, %p96
      %s99 = sadd.s32 %s98, 1
      %p102 = scmp.eq.s32.totalorder %s24, 1
      %p103 = scmp.ne.s32.totalorder %s98, %s100
      %p104 = scmp.eq.s32.totalorder %s24, 0
      %p105 = por %p103, %p104
      %p106 = scmp.ne.s32.totalorder %s98, %s100
      %p107 = scmp.eq.s32.totalorder %s29, 1
      %p108 = por %p106, %p107
      %p109 = scmp.ne.s32.totalorder %s100, %s101
      %p110 = scmp.eq.s32.totalorder %s29, 0
      %p111 = por %p109, %p110
      %p112 = scmp.ne.s32.totalorder %s100, %s101
      %p113 = scmp.eq.s32.totalorder %s30, 1
      %p114 = por %p112, %p113
      %p116 = scmp.ne.s32.totalorder %s101, %s115
      %p117 = scmp.eq.s32.totalorder %s30, 0
      %p118 = por %p116, %p117
      %s119 = ssub.s32 %s31, %s43
      %p120 = scmp.eq.s32.totalorder %s119, 0
      %s122 = sadd.s32 %s121, 1
      %s123 = scalar_select %p120, %s121, %s122
      %p126 = pneg %p120
      %p127 = scmp.eq.s32.totalorder %s24, 1
      %p128 = por %p126, %p127
      %p129 = scmp.ne.s32.totalorder %s121, %s124
      %p130 = scmp.eq.s32.totalorder %s24, 0
      %p131 = por %p129, %p130
      %p132 = scmp.ne.s32.totalorder %s121, %s124
      %p133 = scmp.eq.s32.totalorder %s29, 1
      %p134 = por %p132, %p133
      %p135 = scmp.ne.s32.totalorder %s124, %s125
      %p136 = scmp.eq.s32.totalorder %s29, 0
      %p137 = por %p135, %p136
      %p138 = scmp.ne.s32.totalorder %s124, %s125
      %p139 = scmp.eq.s32.totalorder %s30, 1
      %p140 = por %p138, %p139
      %p142 = scmp.ne.s32.totalorder %s125, %s141
      %p143 = scmp.eq.s32.totalorder %s30, 0
      %p144 = por %p142, %p143
      %s146 = sadd.s32 %s145, 1
      %p149 = scmp.eq.s32.totalorder %s24, 1
      %p150 = scmp.ne.s32.totalorder %s145, %s147
      %p151 = scmp.eq.s32.totalorder %s24, 0
      %p152 = por %p150, %p151
      %p153 = scmp.ne.s32.totalorder %s145, %s147
      %p154 = scmp.eq.s32.totalorder %s29, 1
      %p155 = por %p153, %p154
      %p156 = scmp.ne.s32.totalorder %s147, %s148
      %p157 = scmp.eq.s32.totalorder %s29, 0
      %p158 = por %p156, %p157
      %p159 = scmp.ne.s32.totalorder %s147, %s148
      %p160 = scmp.eq.s32.totalorder %s30, 1
      %p161 = por %p159, %p160
      %p163 = scmp.ne.s32.totalorder %s148, %s162
      %p164 = scmp.eq.s32.totalorder %s30, 0
      %p165 = por %p163, %p164
      %s167 = sadd.s32 %s166, 1
      %p170 = scmp.eq.s32.totalorder %s24, 1
      %p171 = scmp.ne.s32.totalorder %s166, %s168
      %p172 = scmp.eq.s32.totalorder %s24, 0
      %p173 = por %p171, %p172
      %p174 = scmp.ne.s32.totalorder %s166, %s168
      %p175 = scmp.eq.s32.totalorder %s29, 1
      %p176 = por %p174, %p175
      %p177 = scmp.ne.s32.totalorder %s168, %s169
      %p178 = scmp.eq.s32.totalorder %s29, 0
      %p179 = por %p177, %p178
      %p180 = scmp.ne.s32.totalorder %s168, %s169
      %p181 = scmp.eq.s32.totalorder %s30, 1
      %p182 = por %p180, %p181
      %p184 = scmp.ne.s32.totalorder %s169, %s183
      %p185 = scmp.eq.s32.totalorder %s30, 0
      %p186 = por %p184, %p185
      %s188 = sadd.s32 %s187, 1
      %p191 = scmp.eq.s32.totalorder %s24, 1
      %p192 = scmp.ne.s32.totalorder %s187, %s189
      %p193 = scmp.eq.s32.totalorder %s24, 0
      %p194 = por %p192, %p193
      %p195 = scmp.ne.s32.totalorder %s187, %s189
      %p196 = scmp.eq.s32.totalorder %s29, 1
      %p197 = por %p195, %p196
      %p198 = scmp.ne.s32.totalorder %s189, %s190
      %p199 = scmp.eq.s32.totalorder %s29, 0
      %p200 = por %p198, %p199
      %p201 = scmp.ne.s32.totalorder %s189, %s190
      %p202 = scmp.eq.s32.totalorder %s30, 1
      %p203 = por %p201, %p202
      %p205 = scmp.ne.s32.totalorder %s190, %s204
      %p206 = scmp.eq.s32.totalorder %s30, 0
      %p207 = por %p205, %p206
      %s209 = sadd.s32 %s208, 1
      %p212 = scmp.eq.s32.totalorder %s24, 1
      %p213 = scmp.ne.s32.totalorder %s208, %s210
      %p214 = scmp.eq.s32.totalorder %s24, 0
      %p215 = por %p213, %p214
      %p216 = scmp.ne.s32.totalorder %s208, %s210
      %p217 = scmp.eq.s32.totalorder %s29, 1
      %p218 = por %p216, %p217
      %p219 = scmp.ne.s32.totalorder %s210, %s211
      %p220 = scmp.eq.s32.totalorder %s29, 0
      %p221 = por %p219, %p220
      %p222 = scmp.ne.s32.totalorder %s210, %s211
      %p223 = scmp.eq.s32.totalorder %s30, 1
      %p224 = por %p222, %p223
      %p226 = scmp.ne.s32.totalorder %s211, %s225
      %p227 = scmp.eq.s32.totalorder %s30, 0
      %p228 = por %p226, %p227
      %s230 = sadd.s32 %s229, 1
      %p233 = scmp.eq.s32.totalorder %s24, 1
      %p234 = scmp.ne.s32.totalorder %s229, %s231
      %p235 = scmp.eq.s32.totalorder %s24, 0
      %p236 = por %p234, %p235
      %p237 = scmp.ne.s32.totalorder %s229, %s231
      %p238 = scmp.eq.s32.totalorder %s29, 1
      %p239 = por %p237, %p238
      %p240 = scmp.ne.s32.totalorder %s231, %s232
      %p241 = scmp.eq.s32.totalorder %s29, 0
      %p242 = por %p240, %p241
      %p243 = scmp.ne.s32.totalorder %s231, %s232
      %p244 = scmp.eq.s32.totalorder %s30, 1
      %p245 = por %p243, %p244
      %p247 = scmp.ne.s32.totalorder %s232, %s246
      %p248 = scmp.eq.s32.totalorder %s30, 0
      %p249 = por %p247, %p248
      %s250 = ssub.s32 %s31, %s43
      %p251 = scmp.eq.s32.totalorder %s250, 0
      %s253 = sadd.s32 %s252, 1
      %s254 = scalar_select %p251, %s252, %s253
      %p257 = pneg %p251
      %p258 = scmp.eq.s32.totalorder %s24, 1
      %p259 = por %p257, %p258
      %p260 = scmp.ne.s32.totalorder %s252, %s255
      %p261 = scmp.eq.s32.totalorder %s24, 0
      %p262 = por %p260, %p261
      %p263 = scmp.ne.s32.totalorder %s252, %s255
      %p264 = scmp.eq.s32.totalorder %s29, 1
      %p265 = por %p263, %p264
      %p266 = scmp.ne.s32.totalorder %s255, %s256
      %p267 = scmp.eq.s32.totalorder %s29, 0
      %p268 = por %p266, %p267
      %p269 = scmp.ne.s32.totalorder %s255, %s256
      %p270 = scmp.eq.s32.totalorder %s30, 1
      %p271 = por %p269, %p270
      %p273 = scmp.ne.s32.totalorder %s256, %s272
      %p274 = scmp.eq.s32.totalorder %s30, 0
      %p275 = por %p273, %p274
      %p276 = scmp.le.s32.totalorder 1, %s24
      %p277 = scmp.lt.s32.totalorder %s24, 3
      %p278 = pnand %p276, %p277
      %p279 = pneg %p278
      // Predicated region
      $region9: #{tpu_custom_call.1} parent=5 // pred_check
        _
      $region10: #{tpu_custom_call.1} parent=5 // pred_check_branch
        %281 = sbr.rel (%p278) target = $region12
      $region11: #{tpu_custom_call.1} parent=5 // pred_region
        %s282 = ssub.s32 %s24, 1
        // Predicated region
        $region13: #{tpu_custom_call.1} parent=11 // pred_check
          %p283 = pneg %p111
        $region14: #{tpu_custom_call.1} parent=11 // pred_check_branch
          %285 = sbr.rel (%p283) target = $region16
        $region15: #{tpu_custom_call.1} parent=11 // pred_region
          _
        $region16: #{tpu_custom_call.1} parent=11 // pred_fallthru
          _
        // Predicated region
        $region17: #{tpu_custom_call.1} parent=11 // pred_check
          %p286 = pneg %p137
        $region18: #{tpu_custom_call.1} parent=11 // pred_check_branch
          %288 = sbr.rel (%p286) target = $region20
        $region19: #{tpu_custom_call.1} parent=11 // pred_region
          %290 = vsyncadd [#allocation7], 0
          %s291 = smul.addr %s33, 8
          %s292 = scalar_lea.hbm %s3, %s291
          %s294 = sshll.u32 %s292, 4
          %s295 = int_to_ptr.hbm [resolvable:$true] %s294
          %s296 = sshll.u32 [#allocation8], 4
          %s297 = int_to_ptr.vmem [resolvable:$true] %s296
          %299 = dma.hbm_to_vmem [thread:$0]  %s295, 128, %s297, [#allocation7]
        $region20: #{tpu_custom_call.1} parent=11 // pred_fallthru
          _
        // Predicated region
        $region21: #{tpu_custom_call.1} parent=11 // pred_check
          %p300 = pneg %p158
        $region22: #{tpu_custom_call.1} parent=11 // pred_check_branch
          %302 = sbr.rel (%p300) target = $region24
        $region23: #{tpu_custom_call.1} parent=11 // pred_region
          %304 = vsyncadd [#allocation10], 0
          %s305 = sshll.u32 %s4, 4
          %s306 = int_to_ptr.hbm [resolvable:$true] %s305
          %s307 = sshll.u32 [#allocation9], 4
          %s308 = int_to_ptr.vmem [resolvable:$true] %s307
          %313 = dma.hbm_to_vmem [thread:$0]  %s306, 2048, %s308, [#allocation10], 128, 128, 8
        $region24: #{tpu_custom_call.1} parent=11 // pred_fallthru
          _
        // Predicated region
        $region25: #{tpu_custom_call.1} parent=11 // pred_check
          %p314 = pneg %p179
        $region26: #{tpu_custom_call.1} parent=11 // pred_check_branch
          %316 = sbr.rel (%p314) target = $region28
        $region27: #{tpu_custom_call.1} parent=11 // pred_region
          _
        $region28: #{tpu_custom_call.1} parent=11 // pred_fallthru
          _
        // Predicated region
        $region29: #{tpu_custom_call.1} parent=11 // pred_check
          %p317 = pneg %p200
        $region30: #{tpu_custom_call.1} parent=11 // pred_check_branch
          %319 = sbr.rel (%p317) target = $region32
        $region31: #{tpu_custom_call.1} parent=11 // pred_region
          %321 = vsyncadd [#allocation10], 0
          %s322 = sshll.u32 %s6, 4
          %s323 = int_to_ptr.hbm [resolvable:$true] %s322
          %s324 = sshll.u32 [#allocation11], 4
          %s325 = int_to_ptr.vmem [resolvable:$true] %s324
          %330 = dma.hbm_to_vmem [thread:$0]  %s323, 2048, %s325, [#allocation10], 128, 128, 8
        $region32: #{tpu_custom_call.1} parent=11 // pred_fallthru
          _
        // Predicated region
        $region33: #{tpu_custom_call.1} parent=11 // pred_check
          %p331 = pneg %p221
        $region34: #{tpu_custom_call.1} parent=11 // pred_check_branch
          %333 = sbr.rel (%p331) target = $region36
        $region35: #{tpu_custom_call.1} parent=11 // pred_region
          %335 = vsyncadd [#allocation13], 0
          %s336 = sshll.u32 %s7, 4
          %s337 = int_to_ptr.hbm [resolvable:$true] %s336
          %s338 = sshll.u32 [#allocation12], 4
          %s339 = int_to_ptr.vmem [resolvable:$true] %s338
          %344 = dma.hbm_to_vmem [thread:$0]  %s337, 2048, %s339, [#allocation13], 128, 128, 8
        $region36: #{tpu_custom_call.1} parent=11 // pred_fallthru
          _
        // Predicated region
        $region37: #{tpu_custom_call.1} parent=11 // pred_check
          %p345 = pneg %p242
        $region38: #{tpu_custom_call.1} parent=11 // pred_check_branch
          %347 = sbr.rel (%p345) target = $region40
        $region39: #{tpu_custom_call.1} parent=11 // pred_region
          _
        $region40: #{tpu_custom_call.1} parent=11 // pred_fallthru
          _
      $region12: #{tpu_custom_call.1} parent=5 // pred_fallthru
        _
      %p348 = scmp.lt.s32.totalorder %s24, 2
      // Predicated region
      $region41: #{tpu_custom_call.1} parent=5 // pred_check
        %p349 = pneg %p348
      $region42: #{tpu_custom_call.1} parent=5 // pred_check_branch
        %351 = sbr.rel (%p349) target = $region44
      $region43: #{tpu_custom_call.1} parent=5 // pred_region
        // Predicated region
        $region45: #{tpu_custom_call.1} parent=43 // pred_check
          %p352 = pneg %p58
        $region46: #{tpu_custom_call.1} parent=43 // pred_check_branch
          %354 = sbr.rel (%p352) target = $region48
        $region47: #{tpu_custom_call.1} parent=43 // pred_region
          %s355 = sand.u32 %s48, 1
          %s356 = scalar_lea.sflag [#allocation4], %s355
          %s357 = sand.u32 %s48, 1
          %s358 = smul.addr %s357, 32
          %s359 = scalar_lea.vmem [#allocation3], %s358
          %s360 = smul.u32 4, %s32
          %362 = vsyncadd %s356, 0
          %s363 = smul.addr %s31, 8
          %s364 = sadd.s32 %s360, %s363
          %s365 = smul.addr %s364, 8
          %s366 = scalar_lea.hbm %s0, %s365
          %s368 = sshll.u32 %s366, 4
          %s369 = int_to_ptr.hbm [resolvable:$true] %s368
          %s370 = sshll.u32 %s359, 4
          %s371 = int_to_ptr.vmem [resolvable:$true] %s370
          %373 = dma.hbm_to_vmem [thread:$0]  %s369, 512, %s371, %s356
        $region48: #{tpu_custom_call.1} parent=43 // pred_fallthru
          _
        // Predicated region
        $region49: #{tpu_custom_call.1} parent=43 // pred_check
          %p374 = pneg %p84
        $region50: #{tpu_custom_call.1} parent=43 // pred_check_branch
          %376 = sbr.rel (%p374) target = $region52
        $region51: #{tpu_custom_call.1} parent=43 // pred_region
          %s377 = sand.u32 %s24, 1
          %s378 = scalar_lea.sflag [#allocation7], %s377
          %s379 = sand.u32 %s74, 1
          %s380 = smul.addr %s379, 512
          %s381 = scalar_lea.vmem [#allocation6], %s380
          %s382 = smul.u32 64, %s32
          %384 = vsyncadd %s378, 0
          %s385 = smul.addr %s382, 8
          %s386 = scalar_lea.hbm %s1, %s385
          %s387 = sshll.u32 %s386, 4
          %s388 = int_to_ptr.hbm [resolvable:$true] %s387
          %s389 = sshll.u32 %s381, 4
          %s390 = int_to_ptr.vmem [resolvable:$true] %s389
          %395 = dma.hbm_to_vmem [thread:$0]  %s388, 8192, %s390, %s378, 128, 128, 8
        $region52: #{tpu_custom_call.1} parent=43 // pred_fallthru
          _
      $region44: #{tpu_custom_call.1} parent=5 // pred_fallthru
        _
      %p396 = scmp.le.s32.totalorder 1, %s24
      %p397 = scmp.lt.s32.totalorder %s24, 3
      %p398 = pnand %p396, %p397
      %p399 = pneg %p398
      // Predicated region
      $region53: #{tpu_custom_call.1} parent=5 // pred_check
        _
      $region54: #{tpu_custom_call.1} parent=5 // pred_check_branch
        %401 = sbr.rel (%p398) target = $region56
      $region55: #{tpu_custom_call.1} parent=5 // pred_region
        %s402 = ssub.s32 %s24, 1
        %s403 = sand.u32 %s51, 1
        %s404 = scalar_lea.sflag [#allocation4], %s403
        %s405 = sand.u32 %s51, 1
        %s406 = smul.addr %s405, 32
        %s407 = scalar_lea.vmem [#allocation3], %s406
        // Predicated region
        $region57: #{tpu_custom_call.1} parent=55 // pred_check
          %p408 = pneg %p64
        $region58: #{tpu_custom_call.1} parent=55 // pred_check_branch
          %410 = sbr.rel (%p408) target = $region60
        $region59: #{tpu_custom_call.1} parent=55 // pred_region
          %412 = dma.done %s404, 512
        $region60: #{tpu_custom_call.1} parent=55 // pred_fallthru
          _
        %s413 = sand.u32 %s29, 1
        %s414 = scalar_lea.sflag [#allocation7], %s413
        %s415 = sand.u32 %s77, 1
        %s416 = smul.addr %s415, 512
        %s417 = scalar_lea.vmem [#allocation6], %s416
        // Predicated region
        $region61: #{tpu_custom_call.1} parent=55 // pred_check
          %p418 = pneg %p90
        $region62: #{tpu_custom_call.1} parent=55 // pred_check_branch
          %420 = sbr.rel (%p418) target = $region64
        $region63: #{tpu_custom_call.1} parent=55 // pred_region
          %422 = dma.done %s414, 8192
        $region64: #{tpu_custom_call.1} parent=55 // pred_fallthru
          _
        // Predicated region
        $region65: #{tpu_custom_call.1} parent=55 // pred_check
          %p423 = pneg %p137
        $region66: #{tpu_custom_call.1} parent=55 // pred_check_branch
          %425 = sbr.rel (%p423) target = $region68
        $region67: #{tpu_custom_call.1} parent=55 // pred_region
          %427 = dma.done [#allocation7], 128
        $region68: #{tpu_custom_call.1} parent=55 // pred_fallthru
          _
        // Predicated region
        $region69: #{tpu_custom_call.1} parent=55 // pred_check
          %p428 = pneg %p158
        $region70: #{tpu_custom_call.1} parent=55 // pred_check_branch
          %430 = sbr.rel (%p428) target = $region72
        $region71: #{tpu_custom_call.1} parent=55 // pred_region
          %432 = dma.done [#allocation10], 2048
        $region72: #{tpu_custom_call.1} parent=55 // pred_fallthru
          _
        // Predicated region
        $region73: #{tpu_custom_call.1} parent=55 // pred_check
          %p433 = pneg %p200
        $region74: #{tpu_custom_call.1} parent=55 // pred_check_branch
          %435 = sbr.rel (%p433) target = $region76
        $region75: #{tpu_custom_call.1} parent=55 // pred_region
          %437 = dma.done [#allocation10], 2048
        $region76: #{tpu_custom_call.1} parent=55 // pred_fallthru
          _
        // Predicated region
        $region77: #{tpu_custom_call.1} parent=55 // pred_check
          %p438 = pneg %p221
        $region78: #{tpu_custom_call.1} parent=55 // pred_check_branch
          %440 = sbr.rel (%p438) target = $region80
        $region79: #{tpu_custom_call.1} parent=55 // pred_region
          %442 = dma.done [#allocation13], 2048
        $region80: #{tpu_custom_call.1} parent=55 // pred_fallthru
          _
        %s443 = sand.u32 %s51, 1
        %s444 = scalar_lea.sflag [#allocation4], %s443
        %s445 = sand.u32 %s51, 1
        %s446 = smul.addr %s445, 32
        %s447 = scalar_lea.vmem [#allocation3], %s446
        %p448 = pneg %p64
        %p449 = pneg %p61
        %s450 = sand.u32 %s29, 1
        %s451 = scalar_lea.sflag [#allocation7], %s450
        %s452 = sand.u32 %s77, 1
        %s453 = smul.addr %s452, 512
        %s454 = scalar_lea.vmem [#allocation6], %s453
        %p455 = pneg %p90
        %p456 = pneg %p87
        %p457 = pneg %p111
        %p458 = pneg %p108
        %p459 = pneg %p137
        %p460 = pneg %p134
        %p461 = pneg %p158
        %p462 = pneg %p155
        %p463 = pneg %p179
        %p464 = pneg %p176
        %p465 = pneg %p200
        %p466 = pneg %p197
        %p467 = pneg %p221
        %p468 = pneg %p218
        %p469 = pneg %p242
        %p470 = pneg %p239
        %p471 = pneg %p268
        %p472 = pneg %p265
        %s473 = smul.u32 4, %s34
        %s474 = smul.u32 64, %s34
        %p475 = scmp.eq.s32.totalorder %s34, 0
        // Predicated region
        $region81: #{tpu_custom_call.1} parent=55 // pred_check
          %p476 = pneg %p475
        $region82: #{tpu_custom_call.1} parent=55 // pred_check_branch
          %478 = sbr.rel (%p476) target = $region84
        $region83: #{tpu_custom_call.1} parent=55 // pred_region
          %479 = vst [vmem:[#allocation2] sm:$0xff] 0.0
        $region84: #{tpu_custom_call.1} parent=55 // pred_fallthru
          _
        %v480 = vld [vmem:[#allocation2] sm:$0xff]
        %v481 = vld [vmem:[%s407] sm:$0xff]
        %v482 = vld [vmem:[%s407 + $0x8] sm:$0xff]
        %v483 = vld [vmem:[%s407 + $0x10] sm:$0xff]
        %v484 = vld [vmem:[%s407 + $0x18] sm:$0xff]
        %v485 = vld [vmem:[%s417] sm:$0xff]
        %v486 = vld [vmem:[%s417 + $0x8] sm:$0xff]
        %v487 = vld [vmem:[%s417 + $0x10] sm:$0xff]
        %v488 = vld [vmem:[%s417 + $0x18] sm:$0xff]
        %v489 = vld [vmem:[%s417 + $0x20] sm:$0xff]
        %v490 = vld [vmem:[%s417 + $0x28] sm:$0xff]
        %v491 = vld [vmem:[%s417 + $0x30] sm:$0xff]
        %v492 = vld [vmem:[%s417 + $0x38] sm:$0xff]
        %v493 = vld [vmem:[%s417 + $0x40] sm:$0xff]
        %v494 = vld [vmem:[%s417 + $0x48] sm:$0xff]
        %v495 = vld [vmem:[%s417 + $0x50] sm:$0xff]
        %v496 = vld [vmem:[%s417 + $0x58] sm:$0xff]
        %v497 = vld [vmem:[%s417 + $0x60] sm:$0xff]
        %v498 = vld [vmem:[%s417 + $0x68] sm:$0xff]
        %v499 = vld [vmem:[%s417 + $0x70] sm:$0xff]
        %v500 = vld [vmem:[%s417 + $0x78] sm:$0xff]
        %v501 = vld [vmem:[%s417 + $0x80] sm:$0xff]
        %v502 = vld [vmem:[%s417 + $0x88] sm:$0xff]
        %v503 = vld [vmem:[%s417 + $0x90] sm:$0xff]
        %v504 = vld [vmem:[%s417 + $0x98] sm:$0xff]
        %v505 = vld [vmem:[%s417 + $0xa0] sm:$0xff]
        %v506 = vld [vmem:[%s417 + $0xa8] sm:$0xff]
        %v507 = vld [vmem:[%s417 + $0xb0] sm:$0xff]
        %v508 = vld [vmem:[%s417 + $0xb8] sm:$0xff]
        %v509 = vld [vmem:[%s417 + $0xc0] sm:$0xff]
        %v510 = vld [vmem:[%s417 + $0xc8] sm:$0xff]
        %v511 = vld [vmem:[%s417 + $0xd0] sm:$0xff]
        %v512 = vld [vmem:[%s417 + $0xd8] sm:$0xff]
        %v513 = vld [vmem:[%s417 + $0xe0] sm:$0xff]
        %v514 = vld [vmem:[%s417 + $0xe8] sm:$0xff]
        %v515 = vld [vmem:[%s417 + $0xf0] sm:$0xff]
        %v516 = vld [vmem:[%s417 + $0xf8] sm:$0xff]
        %v517 = vld [vmem:[%s417 + $0x100] sm:$0xff]
        %v518 = vld [vmem:[%s417 + $0x108] sm:$0xff]
        %v519 = vld [vmem:[%s417 + $0x110] sm:$0xff]
        %v520 = vld [vmem:[%s417 + $0x118] sm:$0xff]
        %v521 = vld [vmem:[%s417 + $0x120] sm:$0xff]
        %v522 = vld [vmem:[%s417 + $0x128] sm:$0xff]
        %v523 = vld [vmem:[%s417 + $0x130] sm:$0xff]
        %v524 = vld [vmem:[%s417 + $0x138] sm:$0xff]
        %v525 = vld [vmem:[%s417 + $0x140] sm:$0xff]
        %v526 = vld [vmem:[%s417 + $0x148] sm:$0xff]
        %v527 = vld [vmem:[%s417 + $0x150] sm:$0xff]
        %v528 = vld [vmem:[%s417 + $0x158] sm:$0xff]
        %v529 = vld [vmem:[%s417 + $0x160] sm:$0xff]
        %v530 = vld [vmem:[%s417 + $0x168] sm:$0xff]
        %v531 = vld [vmem:[%s417 + $0x170] sm:$0xff]
        %v532 = vld [vmem:[%s417 + $0x178] sm:$0xff]
        %v533 = vld [vmem:[%s417 + $0x180] sm:$0xff]
        %v534 = vld [vmem:[%s417 + $0x188] sm:$0xff]
        %v535 = vld [vmem:[%s417 + $0x190] sm:$0xff]
        %v536 = vld [vmem:[%s417 + $0x198] sm:$0xff]
        %v537 = vld [vmem:[%s417 + $0x1a0] sm:$0xff]
        %v538 = vld [vmem:[%s417 + $0x1a8] sm:$0xff]
        %v539 = vld [vmem:[%s417 + $0x1b0] sm:$0xff]
        %v540 = vld [vmem:[%s417 + $0x1b8] sm:$0xff]
        %v541 = vld [vmem:[%s417 + $0x1c0] sm:$0xff]
        %v542 = vld [vmem:[%s417 + $0x1c8] sm:$0xff]
        %v543 = vld [vmem:[%s417 + $0x1d0] sm:$0xff]
        %v544 = vld [vmem:[%s417 + $0x1d8] sm:$0xff]
        %v545 = vld [vmem:[%s417 + $0x1e0] sm:$0xff]
        %v546 = vld [vmem:[%s417 + $0x1e8] sm:$0xff]
        %v547 = vld [vmem:[%s417 + $0x1f0] sm:$0xff]
        %v548 = vld [vmem:[%s417 + $0x1f8] sm:$0xff]
        %549 = vmatpush.msra.mxu0 %v500
        %550 = vmatpush.msra.mxu0 %v499
        %551 = vmatpush.msra.mxu0 %v498
        %552 = vmatpush.msra.mxu0 %v497
        %553 = vmatpush.msra.mxu0 %v496
        %554 = vmatpush.msra.mxu0 %v495
        %555 = vmatpush.msra.mxu0 %v494
        %556 = vmatpush.msra.mxu0 %v493
        %557 = vmatpush.msra.mxu0 %v492
        %558 = vmatpush.msra.mxu0 %v491
        %559 = vmatpush.msra.mxu0 %v490
        %560 = vmatpush.msra.mxu0 %v489
        %561 = vmatpush.msra.mxu0 %v488
        %562 = vmatpush.msra.mxu0 %v487
        %563 = vmatpush.msra.mxu0 %v486
        %564 = vmatpush.msra.mxu0 %v485
        %565 = vmatmul.f32.gmra.mxu0 %v481
        %v566 = vpop.f32.mrf.mxu0
        %v567 = vadd.f32 0.0, %v566
        %568 = vdwg.mxu0
        %569 = vmatpush.msra.mxu0 %v516
        %570 = vmatpush.msra.mxu0 %v515
        %571 = vmatpush.msra.mxu0 %v514
        %572 = vmatpush.msra.mxu0 %v513
        %573 = vmatpush.msra.mxu0 %v512
        %574 = vmatpush.msra.mxu0 %v511
        %575 = vmatpush.msra.mxu0 %v510
        %576 = vmatpush.msra.mxu0 %v509
        %577 = vmatpush.msra.mxu0 %v508
        %578 = vmatpush.msra.mxu0 %v507
        %579 = vmatpush.msra.mxu0 %v506
        %580 = vmatpush.msra.mxu0 %v505
        %581 = vmatpush.msra.mxu0 %v504
        %582 = vmatpush.msra.mxu0 %v503
        %583 = vmatpush.msra.mxu0 %v502
        %584 = vmatpush.msra.mxu0 %v501
        %585 = vmatmul.f32.gmra.mxu0 %v482
        %v586 = vpop.f32.mrf.mxu0
        %v587 = vadd.f32 %v567, %v586
        %588 = vdwg.mxu0
        %589 = vmatpush.msra.mxu0 %v532
        %590 = vmatpush.msra.mxu0 %v531
        %591 = vmatpush.msra.mxu0 %v530
        %592 = vmatpush.msra.mxu0 %v529
        %593 = vmatpush.msra.mxu0 %v528
        %594 = vmatpush.msra.mxu0 %v527
        %595 = vmatpush.msra.mxu0 %v526
        %596 = vmatpush.msra.mxu0 %v525
        %597 = vmatpush.msra.mxu0 %v524
        %598 = vmatpush.msra.mxu0 %v523
        %599 = vmatpush.msra.mxu0 %v522
        %600 = vmatpush.msra.mxu0 %v521
        %601 = vmatpush.msra.mxu0 %v520
        %602 = vmatpush.msra.mxu0 %v519
        %603 = vmatpush.msra.mxu0 %v518
        %604 = vmatpush.msra.mxu0 %v517
        %605 = vmatmul.f32.gmra.mxu0 %v483
        %v606 = vpop.f32.mrf.mxu0
        %v607 = vadd.f32 %v587, %v606
        %608 = vdwg.mxu0
        %609 = vmatpush.msra.mxu0 %v548
        %610 = vmatpush.msra.mxu0 %v547
        %611 = vmatpush.msra.mxu0 %v546
        %612 = vmatpush.msra.mxu0 %v545
        %613 = vmatpush.msra.mxu0 %v544
        %614 = vmatpush.msra.mxu0 %v543
        %615 = vmatpush.msra.mxu0 %v542
        %616 = vmatpush.msra.mxu0 %v541
        %617 = vmatpush.msra.mxu0 %v540
        %618 = vmatpush.msra.mxu0 %v539
        %619 = vmatpush.msra.mxu0 %v538
        %620 = vmatpush.msra.mxu0 %v537
        %621 = vmatpush.msra.mxu0 %v536
        %622 = vmatpush.msra.mxu0 %v535
        %623 = vmatpush.msra.mxu0 %v534
        %624 = vmatpush.msra.mxu0 %v533
        %625 = vmatmul.f32.gmra.mxu0 %v484
        %v626 = vpop.f32.mrf.mxu0
        %v627 = vadd.f32 %v607, %v626
        %628 = vdwg.mxu0
        %v629 = vadd.f32 %v480, %v627
        %630 = vst [vmem:[#allocation2] sm:$0xff] %v629
        %p631 = scmp.eq.s32.totalorder %s34, 1
        // Predicated region
        $region85: #{tpu_custom_call.1} parent=55 // pred_check
          %p632 = pneg %p631
        $region86: #{tpu_custom_call.1} parent=55 // pred_check_branch
          %634 = sbr.rel (%p632) target = $region88
        $region87: #{tpu_custom_call.1} parent=55 // pred_region
          %v635 = vld [vmem:[#allocation2] sm:$0xff]
          %v636 = vld [vmem:[%s2] sm:$0x1]
          %v638 = vperm.slane %v636, 0
          %v640 = vadd.f32 %v635, %v638
          %v641 = vmax.f32 %v640, 0.0
          %v642 = vld [vmem:[#allocation8] sm:$0xff]
          %v643 = vld [vmem:[#allocation9] sm:$0xff]
          %v644 = vld [vmem:[#allocation9 + $0x8] sm:$0xff]
          %v645 = vld [vmem:[#allocation9 + $0x10] sm:$0xff]
          %v646 = vld [vmem:[#allocation9 + $0x18] sm:$0xff]
          %v647 = vld [vmem:[#allocation9 + $0x20] sm:$0xff]
          %v648 = vld [vmem:[#allocation9 + $0x28] sm:$0xff]
          %v649 = vld [vmem:[#allocation9 + $0x30] sm:$0xff]
          %v650 = vld [vmem:[#allocation9 + $0x38] sm:$0xff]
          %v651 = vld [vmem:[#allocation9 + $0x40] sm:$0xff]
          %v652 = vld [vmem:[#allocation9 + $0x48] sm:$0xff]
          %v653 = vld [vmem:[#allocation9 + $0x50] sm:$0xff]
          %v654 = vld [vmem:[#allocation9 + $0x58] sm:$0xff]
          %v655 = vld [vmem:[#allocation9 + $0x60] sm:$0xff]
          %v656 = vld [vmem:[#allocation9 + $0x68] sm:$0xff]
          %v657 = vld [vmem:[#allocation9 + $0x70] sm:$0xff]
          %v658 = vld [vmem:[#allocation9 + $0x78] sm:$0xff]
          %v659 = vld [vmem:[%s5] sm:$0x1]
          %v661 = vperm.slane %v659, 0
          %663 = vmatpush.msra.mxu0 %v658
          %664 = vmatpush.msra.mxu0 %v657
          %665 = vmatpush.msra.mxu0 %v656
          %666 = vmatpush.msra.mxu0 %v655
          %667 = vmatpush.msra.mxu0 %v654
          %668 = vmatpush.msra.mxu0 %v653
          %669 = vmatpush.msra.mxu0 %v652
          %670 = vmatpush.msra.mxu0 %v651
          %671 = vmatpush.msra.mxu0 %v650
          %672 = vmatpush.msra.mxu0 %v649
          %673 = vmatpush.msra.mxu0 %v648
          %674 = vmatpush.msra.mxu0 %v647
          %675 = vmatpush.msra.mxu0 %v646
          %676 = vmatpush.msra.mxu0 %v645
          %677 = vmatpush.msra.mxu0 %v644
          %678 = vmatpush.msra.mxu0 %v643
          %679 = vmatmul.f32.gmra.mxu0 %v642
          %v680 = vpop.f32.mrf.mxu0
          %v681 = vadd.f32 %v661, %v680
          %682 = vdwg.mxu0
          %v683 = vmax.f32 %v681, 0.0
          %v684 = vld [vmem:[#allocation11] sm:$0xff]
          %v685 = vld [vmem:[#allocation11 + $0x8] sm:$0xff]
          %v686 = vld [vmem:[#allocation11 + $0x10] sm:$0xff]
          %v687 = vld [vmem:[#allocation11 + $0x18] sm:$0xff]
          %v688 = vld [vmem:[#allocation11 + $0x20] sm:$0xff]
          %v689 = vld [vmem:[#allocation11 + $0x28] sm:$0xff]
          %v690 = vld [vmem:[#allocation11 + $0x30] sm:$0xff]
          %v691 = vld [vmem:[#allocation11 + $0x38] sm:$0xff]
          %v692 = vld [vmem:[#allocation11 + $0x40] sm:$0xff]
          %v693 = vld [vmem:[#allocation11 + $0x48] sm:$0xff]
          %v694 = vld [vmem:[#allocation11 + $0x50] sm:$0xff]
          %v695 = vld [vmem:[#allocation11 + $0x58] sm:$0xff]
          %v696 = vld [vmem:[#allocation11 + $0x60] sm:$0xff]
          %v697 = vld [vmem:[#allocation11 + $0x68] sm:$0xff]
          %v698 = vld [vmem:[#allocation11 + $0x70] sm:$0xff]
          %v699 = vld [vmem:[#allocation11 + $0x78] sm:$0xff]
          %v700 = vld [vmem:[#allocation12] sm:$0xff]
          %v701 = vld [vmem:[#allocation12 + $0x8] sm:$0xff]
          %v702 = vld [vmem:[#allocation12 + $0x10] sm:$0xff]
          %v703 = vld [vmem:[#allocation12 + $0x18] sm:$0xff]
          %v704 = vld [vmem:[#allocation12 + $0x20] sm:$0xff]
          %v705 = vld [vmem:[#allocation12 + $0x28] sm:$0xff]
          %v706 = vld [vmem:[#allocation12 + $0x30] sm:$0xff]
          %v707 = vld [vmem:[#allocation12 + $0x38] sm:$0xff]
          %v708 = vld [vmem:[#allocation12 + $0x40] sm:$0xff]
          %v709 = vld [vmem:[#allocation12 + $0x48] sm:$0xff]
          %v710 = vld [vmem:[#allocation12 + $0x50] sm:$0xff]
          %v711 = vld [vmem:[#allocation12 + $0x58] sm:$0xff]
          %v712 = vld [vmem:[#allocation12 + $0x60] sm:$0xff]
          %v713 = vld [vmem:[#allocation12 + $0x68] sm:$0xff]
          %v714 = vld [vmem:[#allocation12 + $0x70] sm:$0xff]
          %v715 = vld [vmem:[#allocation12 + $0x78] sm:$0xff]
          %716 = vmatpush.msra.mxu0 %v715
          %717 = vmatpush.msra.mxu0 %v714
          %718 = vmatpush.msra.mxu0 %v713
          %719 = vmatpush.msra.mxu0 %v712
          %720 = vmatpush.msra.mxu0 %v711
          %721 = vmatpush.msra.mxu0 %v710
          %722 = vmatpush.msra.mxu0 %v709
          %723 = vmatpush.msra.mxu0 %v708
          %724 = vmatpush.msra.mxu0 %v707
          %725 = vmatpush.msra.mxu0 %v706
          %726 = vmatpush.msra.mxu0 %v705
          %727 = vmatpush.msra.mxu0 %v704
          %728 = vmatpush.msra.mxu0 %v703
          %729 = vmatpush.msra.mxu0 %v702
          %730 = vmatpush.msra.mxu0 %v701
          %731 = vmatpush.msra.mxu0 %v700
          %732 = vmatmul.f32.gmra.mxu0 %v683
          %v733 = vpop.f32.mrf.mxu0
          %v734 = vadd.f32 0.0, %v733
          %735 = vdwg.mxu0
          %736 = vmatpush.msra.mxu0 %v699
          %737 = vmatpush.msra.mxu0 %v698
          %738 = vmatpush.msra.mxu0 %v697
          %739 = vmatpush.msra.mxu0 %v696
          %740 = vmatpush.msra.mxu0 %v695
          %741 = vmatpush.msra.mxu0 %v694
          %742 = vmatpush.msra.mxu0 %v693
          %743 = vmatpush.msra.mxu0 %v692
          %744 = vmatpush.msra.mxu0 %v691
          %745 = vmatpush.msra.mxu0 %v690
          %746 = vmatpush.msra.mxu0 %v689
          %747 = vmatpush.msra.mxu0 %v688
          %748 = vmatpush.msra.mxu0 %v687
          %749 = vmatpush.msra.mxu0 %v686
          %750 = vmatpush.msra.mxu0 %v685
          %751 = vmatpush.msra.mxu0 %v684
          %752 = vmatmul.f32.gmra.mxu0 %v641
          %v753 = vpop.f32.mrf.mxu0
          %v754 = vadd.f32 %v734, %v753
          %755 = vdwg.mxu0
          %v756 = vld [vmem:[%s8] sm:$0x1]
          %v758 = vperm.slane %v756, 0
          %v760 = vadd.f32 %v754, %v758
          %761 = vst [vmem:[#allocation14] sm:$0xff] %v760
        $region88: #{tpu_custom_call.1} parent=55 // pred_fallthru
          _
        // Predicated region
        $region89: #{tpu_custom_call.1} parent=55 // pred_check
          %p762 = pneg %p265
        $region90: #{tpu_custom_call.1} parent=55 // pred_check_branch
          %764 = sbr.rel (%p762) target = $region92
        $region91: #{tpu_custom_call.1} parent=55 // pred_region
          %766 = vsyncadd [#allocation5], 0
          %s767 = smul.addr %s33, 8
          %s768 = scalar_lea.hbm %s9, %s767
          %s770 = sshll.u32 [#allocation14], 4
          %s771 = int_to_ptr.vmem [resolvable:$true] %s770
          %s772 = sshll.u32 %s768, 4
          %s773 = int_to_ptr.hbm [resolvable:$true] %s772
          %775 = dma.vmem_to_hbm [thread:$0]  %s771, 128, %s773, [#allocation5]
        $region92: #{tpu_custom_call.1} parent=55 // pred_fallthru
          _
        // Predicated region
        $region93: #{tpu_custom_call.1} parent=55 // pred_check
          %p776 = pneg %p265
        $region94: #{tpu_custom_call.1} parent=55 // pred_check_branch
          %778 = sbr.rel (%p776) target = $region96
        $region95: #{tpu_custom_call.1} parent=55 // pred_region
          %780 = dma.done [#allocation5], 128
        $region96: #{tpu_custom_call.1} parent=55 // pred_fallthru
          _
      $region56: #{tpu_custom_call.1} parent=5 // pred_fallthru
        _
      %p781 = scmp.le.s32.totalorder 2, %s24
      // Predicated region
      $region97: #{tpu_custom_call.1} parent=5 // pred_check
        %p782 = pneg %p781
      $region98: #{tpu_custom_call.1} parent=5 // pred_check_branch
        %784 = sbr.rel (%p782) target = $region100
      $region99: #{tpu_custom_call.1} parent=5 // pred_region
        %s785 = ssub.s32 %s24, 2
      $region100: #{tpu_custom_call.1} parent=5 // pred_fallthru
        _
    $region6: #{tpu_custom_call.1} parent=1 // loop_footer
      %s28 = sadd.s32 1, %s24
    $region7: #{tpu_custom_call.1} parent=1 // loop_footer_branch
      %23 = sbr.rel target = $region3
    $region8: #{tpu_custom_call.1} parent=1 // loop_exit
      _
    %786 = vsyncpa [#allocation4], 1
    %s787 = scalar_lea.sflag [#allocation4], 1
    %788 = vsyncpa %s787, 1
    %789 = vsyncpa [#allocation7], 1
    %s790 = scalar_lea.sflag [#allocation7], 1
    %791 = vsyncpa %s790, 1
    %792 = vsyncpa [#allocation10], 1
    %793 = vsyncpa [#allocation13], 1
    %794 = vsyncpa [#allocation5], 1
    %s795 = scalar_lea.sflag [#allocation5], 1
    %796 = vsyncpa %s795, 1

</llo_original>
